<compile_context>
chip_gen: v6e
topology: v6e:2x2x1
jax: 0.10.0
libtpu: 0.0.40
codegen_flags: <defaults>
</compile_context>

<pallas_src>
from functools import partial

import jax
import jax.numpy as jnp
from jax.experimental import pallas as pl
from jax.experimental.pallas import tpu as pltpu


TILE_P = 1024                     # lane tile for the gridded path (v7x-safe, v6e sweet spot)
FAST_PATH_MAX_P = 2048            # below this the whole layer stays resident in VMEM
VMEM_LIMIT_BYTES = 48 * 1024 * 1024


# ----------------------------- Pallas kernels --------------------------------

def _conv_bias_act(w_ref, b_ref, p_ref, do_act):
    # (Cout, Cin*K*K) bf16 @ (Cin*K*K, P) bf16 -> (Cout, P) f32 accumulation
    y = jnp.dot(w_ref[...], p_ref[...], preferred_element_type=jnp.float32)
    y = y + b_ref[...]                          # (Cout, P) + (Cout, 1)
    if do_act:
        y = jnp.where(y >= 0.0, y, 0.01 * y)    # LeakyReLU(0.01)
    return y


def _fused_small_kernel(w_ref, b_ref, p_ref, o_ref, *, do_act, do_norm, n_rows):
    """Whole layer resident: conv + bias [+ LeakyReLU] [+ normLayer], lane-dense output."""
    y = _conv_bias_act(w_ref, b_ref, p_ref, do_act)
    if do_norm:
        # normLayer: per-channel mean + unbiased std over all spatial positions (lane axis).
        # NOTE: matches torch semantics; for a degenerate 1x1 spatial map (n_rows == 1) the
        # unbiased std divides by zero, exactly like torch.std() returning NaN.
        mean = jnp.mean(y, axis=-1, keepdims=True)
        c = y - mean
        var = jnp.sum(c * c, axis=-1, keepdims=True) / (n_rows - 1.0)
        std = jnp.sqrt(var)
        y = c * pl.reciprocal(std + 1e-07, approx=True)
    o_ref[...] = y


def _conv_act_stats_kernel(w_ref, b_ref, p_ref, y_ref, sum_ref, ssq_ref, *,
                           do_act, p_valid, tile_p):
    """Tiled pass 1: conv + bias + act per P tile, accumulate f32 sum / sum-of-squares."""
    i = pl.program_id(0)

    @pl.when(i == 0)
    def _init():
        sum_ref[...] = jnp.zeros_like(sum_ref)
        ssq_ref[...] = jnp.zeros_like(ssq_ref)

    y = _conv_bias_act(w_ref, b_ref, p_ref, do_act)
    y_ref[...] = y

    # Only the first `p_valid` lanes of the (padded) P axis are real pixels.
    col = jax.lax.broadcasted_iota(jnp.int32, y.shape, 1) + i * tile_p
    ym = jnp.where(col < p_valid, y, 0.0)
    sum_ref[...] += jnp.sum(ym, axis=-1, keepdims=True)
    ssq_ref[...] += jnp.sum(ym * ym, axis=-1, keepdims=True)


def _conv_act_kernel(w_ref, b_ref, p_ref, y_ref, *, do_act):
    """Tiled path, no-norm variant (last layer with last_norm=False)."""
    y_ref[...] = _conv_bias_act(w_ref, b_ref, p_ref, do_act)


def _norm_kernel(y_ref, sum_ref, ssq_ref, o_ref, *, n_rows):
    """Tiled pass 2: apply per-channel (x - mean) / (std + eps) using accumulated stats."""
    n = float(n_rows)
    mean = sum_ref[...] / n
    var = (ssq_ref[...] - sum_ref[...] * mean) / (n - 1.0)     # unbiased, f32 accumulators
    std = jnp.sqrt(jnp.maximum(var, 0.0))
    o_ref[...] = (y_ref[...] - mean) * pl.reciprocal(std + 1e-07, approx=True)


# ------------------------------- JAX glue -------------------------------------

def _im2col_t(x_chw, k, stride, pad):
    """(C, H, W) -> bf16 patches of shape (C*K*K, H_out*W_out), rows ordered (c, ki, kj)
    to match PyTorch's Conv2d weight layout (Cout, Cin, K, K).reshape(Cout, Cin*K*K)."""
    c, h, w = x_chw.shape
    xp = jnp.pad(x_chw, ((0, 0), (pad, pad), (pad, pad)))
    h_out = (h + 2 * pad - k) // stride + 1
    w_out = (w + 2 * pad - k) // stride + 1
    taps = []
    for di in range(k):
        for dj in range(k):
            taps.append(xp[:, di:di + stride * h_out:stride,
                              dj:dj + stride * w_out:stride])   # (C, H_out, W_out)
    pat = jnp.stack(taps, axis=1)                               # (C, K*K, H_out, W_out)
    pat = pat.reshape(c * k * k, h_out * w_out)                 # (C*K*K, P)
    return pat.astype(jnp.bfloat16), h_out, w_out


def _layer_small(patches, w_mat, b_mat, *, do_act, do_norm, n_rows):
    c_out = w_mat.shape[0]
    vmem = pl.BlockSpec(memory_space=pltpu.MemorySpace.VMEM)
    kernel = partial(_fused_small_kernel, do_act=do_act, do_norm=do_norm, n_rows=n_rows)
    return pl.pallas_call(
        kernel,
        out_shape=jax.ShapeDtypeStruct((c_out, n_rows), jnp.float32),
        in_specs=[vmem, vmem, vmem],
        out_specs=vmem,
        compiler_params=pltpu.CompilerParams(vmem_limit_bytes=VMEM_LIMIT_BYTES),
    )(w_mat, b_mat, patches)


def _layer_tiled(patches, w_mat, b_mat, *, do_act, do_norm, n_rows):
    c_out, ckk = w_mat.shape
    p_pad = ((n_rows + TILE_P - 1) // TILE_P) * TILE_P
    if p_pad != n_rows:
        patches = jnp.pad(patches, ((0, 0), (0, p_pad - n_rows)))
    nt = p_pad // TILE_P

    w_spec = pl.BlockSpec((c_out, ckk), lambda i: (0, 0))
    b_spec = pl.BlockSpec((c_out, 1), lambda i: (0, 0))
    p_spec = pl.BlockSpec((ckk, TILE_P), lambda i: (0, i))
    y_spec = pl.BlockSpec((c_out, TILE_P), lambda i: (0, i))
    s_spec = pl.BlockSpec((c_out, 1), lambda i: (0, 0))

    if not do_norm:
        kernel = partial(_conv_act_kernel, do_act=do_act)
        y = pl.pallas_call(
            kernel,
            out_shape=jax.ShapeDtypeStruct((c_out, p_pad), jnp.float32),
            grid=(nt,),
            in_specs=[w_spec, b_spec, p_spec],
            out_specs=y_spec,
            compiler_params=pltpu.CompilerParams(
                dimension_semantics=("parallel",),
                vmem_limit_bytes=VMEM_LIMIT_BYTES),
        )(w_mat, b_mat, patches)
        return y[:, :n_rows]

    # Pass 1: conv + act tiles, accumulate per-channel sum / sumsq (resident accumulator blocks).
    kernel = partial(_conv_act_stats_kernel, do_act=do_act, p_valid=n_rows, tile_p=TILE_P)
    y, s, ss = pl.pallas_call(
        kernel,
        out_shape=(jax.ShapeDtypeStruct((c_out, p_pad), jnp.float32),
                   jax.ShapeDtypeStruct((c_out, 1), jnp.float32),
                   jax.ShapeDtypeStruct((c_out, 1), jnp.float32)),
        grid=(nt,),
        in_specs=[w_spec, b_spec, p_spec],
        out_specs=(y_spec, s_spec, s_spec),
        compiler_params=pltpu.CompilerParams(
            dimension_semantics=("arbitrary",),      # stats blocks are revisited every step
            vmem_limit_bytes=VMEM_LIMIT_BYTES),
    )(w_mat, b_mat, patches)

    # Pass 2: normalize each tile with the global stats, in place.
    norm_kernel = partial(_norm_kernel, n_rows=n_rows)
    out = pl.pallas_call(
        norm_kernel,
        out_shape=jax.ShapeDtypeStruct((c_out, p_pad), jnp.float32),
        grid=(nt,),
        in_specs=[y_spec, s_spec, s_spec],
        out_specs=y_spec,
        input_output_aliases={0: 0},                 # normalize y in place (no extra HBM buffer)
        compiler_params=pltpu.CompilerParams(
            dimension_semantics=("parallel",),       # independent tiles -> both TCs on v7x
            vmem_limit_bytes=VMEM_LIMIT_BYTES),
    )(y, s, ss)
    return out[:, :n_rows]


def conv_block(x_nchw, weight, bias, *, stride, do_act, do_norm):
    """One BasicDecoder1 block: Conv2d(k, stride, pad=k//2) [+ LeakyReLU] [+ normLayer]."""
    assert x_nchw.shape[0] == 1, "normLayer requires batch == 1"
    c_out, c_in, k, _ = weight.shape
    pad = k // 2

    patches, h_out, w_out = _im2col_t(x_nchw[0], k, stride, pad)
    n_rows = h_out * w_out

    w_mat = weight.reshape(c_out, c_in * k * k).astype(jnp.bfloat16)   # bf16 MXU operand
    b_mat = bias.reshape(c_out, 1).astype(jnp.float32)                 # f32 epilogue

    if n_rows <= FAST_PATH_MAX_P:
        y = _layer_small(patches, w_mat, b_mat, do_act=do_act, do_norm=do_norm, n_rows=n_rows)
    else:
        y = _layer_tiled(patches, w_mat, b_mat, do_act=do_act, do_norm=do_norm, n_rows=n_rows)

    # Lane-dense (Cout, P): no transpose needed before NCHW reshape.
    return y.reshape(1, c_out, h_out, w_out)


class BasicDecoder1Pallas:
    def __init__(self, data_depth, hidden_size, num_layers, kernel_size, last_norm, key):
        self.data_depth = data_depth
        self.hidden_size = hidden_size
        self.num_layers = num_layers          # unused, mirrors the reference module
        self.kernel_size = kernel_size
        self.last_norm = last_norm
        self.params = self._init_params(key)
        self._forward = jax.jit(self._forward_impl)

    def _init_params(self, key):
        k = self.kernel_size
        # (in_ch, out_ch, stride) for each conv in _build_models
        cfg = [
            (3, self.hidden_size, 1),
            (self.hidden_size, self.hidden_size, 2),
            (self.hidden_size, self.hidden_size, 1),
            (self.hidden_size, self.data_depth * 16, 2),
        ]
        params = []
        for (cin, cout, stride) in cfg:
            key, kw, kb = jax.random.split(key, 3)
            fan_in = cin * k * k
            bound = 1.0 / (fan_in ** 0.5)
            w = jax.random.uniform(kw, (cout, cin, k, k), jnp.float32, -bound, bound)
            b = jax.random.uniform(kb, (cout,), jnp.float32, -bound, bound)
            params.append((w, b, stride))
        return params

    def _forward_impl(self, x):
        # blocks 0..2: conv + LeakyReLU + normLayer ; block 3: conv (+ normLayer if last_norm)
        for i, (w, b, stride) in enumerate(self.params):
            is_last = (i == len(self.params) - 1)
            x = conv_block(x, w, b, stride=stride,
                           do_act=not is_last,
                           do_norm=(not is_last) or self.last_norm)
        return x

    def __call__(self, x):
        return self._forward(x)


if __name__ == "__main__":
    key = jax.random.PRNGKey(0)
    key, kx_small, kx_big = jax.random.split(key, 3)

    model = BasicDecoder1Pallas(
        data_depth=1, hidden_size=8, num_layers=3, kernel_size=3, last_norm=True, key=key,
    )

    # Small input: every layer takes the single-pass resident-VMEM kernel.
    x_small = jax.random.normal(kx_small, (1, 3, 16, 16), jnp.float32)
    out_small = jax.block_until_ready(model(x_small))
    assert out_small.shape == (1, 16, 4, 4), out_small.shape
    assert bool(jnp.isfinite(out_small).all())

    # Larger input: layers 1-3 take the gridded (tiled P + accumulated-stats) path,
    # including a partially padded last tile on the stride-2 layers.
    x_big = jax.random.normal(kx_big, (1, 3, 96, 96), jnp.float32)
    out_big = jax.block_until_ready(model(x_big))
    assert out_big.shape == (1, 16, 24, 24), out_big.shape
    assert bool(jnp.isfinite(out_big).all())

    print("KERNEL_OK")
</pallas_src>

<mosaic_0001>
module attributes {stable_mosaic.version = 11 : i64} {
  func.func @_fused_small_kernel(%arg0: memref<8x27xbf16, #tpu.memory_space<vmem>>, %arg1: memref<8x1xf32, #tpu.memory_space<vmem>>, %arg2: memref<27x256xbf16, #tpu.memory_space<vmem>>, %arg3: memref<8x256xf32, #tpu.memory_space<vmem>>) attributes {dimension_semantics = [], scalar_prefetch = 0 : i64, scratch_operands = 0 : i64, tpu.core_type = #tpu.core_type<tc>} {
    %c0 = arith.constant 0 : index
    %c0_0 = arith.constant 0 : index
    %0 = vector.load %arg0[%c0, %c0_0] : memref<8x27xbf16, #tpu.memory_space<vmem>>, vector<8x27xbf16>
    %c0_1 = arith.constant 0 : index
    %c0_2 = arith.constant 0 : index
    %1 = vector.load %arg2[%c0_1, %c0_2] : memref<27x256xbf16, #tpu.memory_space<vmem>>, vector<27x256xbf16>
    %cst = arith.constant dense<0.000000e+00> : vector<8x256xf32>
    %2 = tpu.matmul %0, %1, %cst {dimension_numbers = #tpu.dot_dimension_numbers<[1], [0], [0], [1], [0, 0, 1, 1], [], []>} : vector<8x27xbf16>, vector<27x256xbf16>, vector<8x256xf32> -> vector<8x256xf32>
    %c0_3 = arith.constant 0 : index
    %c0_4 = arith.constant 0 : index
    %3 = vector.load %arg1[%c0_3, %c0_4] : memref<8x1xf32, #tpu.memory_space<vmem>>, vector<8x1xf32>
    %4 = vector.broadcast %3 : vector<8x1xf32> to vector<8x256xf32>
    %5 = arith.addf %2, %4 : vector<8x256xf32>
    %cst_5 = arith.constant 0.000000e+00 : f32
    %6 = vector.broadcast %cst_5 : f32 to vector<8x256xf32>
    %7 = arith.cmpf oge, %5, %6 : vector<8x256xf32>
    %cst_6 = arith.constant 0.00999999977 : f32
    %8 = vector.broadcast %cst_6 : f32 to vector<8x256xf32>
    %9 = arith.mulf %8, %5 : vector<8x256xf32>
    %10 = arith.select %7, %5, %9 : vector<8x256xi1>, vector<8x256xf32>
    %cst_7 = arith.constant dense<0.000000e+00> : vector<8xf32>
    %11 = vector.multi_reduction <add>, %10, %cst_7 [1] : vector<8x256xf32> to vector<8xf32>
    %12 = vector.shape_cast %11 : vector<8xf32> to vector<8x1xf32>
    %cst_8 = arith.constant 2.560000e+02 : f32
    %13 = vector.broadcast %cst_8 : f32 to vector<8x1xf32>
    %14 = arith.divf %12, %13 : vector<8x1xf32>
    %15 = vector.broadcast %14 : vector<8x1xf32> to vector<8x256xf32>
    %16 = arith.subf %10, %15 : vector<8x256xf32>
    %17 = arith.mulf %16, %16 : vector<8x256xf32>
    %cst_9 = arith.constant dense<0.000000e+00> : vector<8xf32>
    %18 = vector.multi_reduction <add>, %17, %cst_9 [1] : vector<8x256xf32> to vector<8xf32>
    %19 = vector.shape_cast %18 : vector<8xf32> to vector<8x1xf32>
    %cst_10 = arith.constant 2.550000e+02 : f32
    %20 = vector.broadcast %cst_10 : f32 to vector<8x1xf32>
    %21 = arith.divf %19, %20 : vector<8x1xf32>
    %22 = math.sqrt %21 : vector<8x1xf32>
    %cst_11 = arith.constant 1.000000e-07 : f32
    %23 = vector.broadcast %cst_11 : f32 to vector<8x1xf32>
    %24 = arith.addf %22, %23 : vector<8x1xf32>
    %25 = tpu.reciprocal %24 {approx = true} : vector<8x1xf32> -> vector<8x1xf32>
    %26 = vector.broadcast %25 : vector<8x1xf32> to vector<8x256xf32>
    %27 = arith.mulf %16, %26 : vector<8x256xf32>
    %c0_12 = arith.constant 0 : index
    %c0_13 = arith.constant 0 : index
    %28 = vector.load %arg3[%c0_12, %c0_13] : memref<8x256xf32, #tpu.memory_space<vmem>>, vector<8x256xf32>
    tpu.vector_store %arg3[%c0_12, %c0_13], %27 {strides = array<i32>} : memref<8x256xf32, #tpu.memory_space<vmem>>, vector<8x256xf32>,
    return
  }
}

module attributes {stable_mosaic.version = 11 : i64} {
  func.func @_fused_small_kernel(%arg0: memref<8x72xbf16, #tpu.memory_space<vmem>>, %arg1: memref<8x1xf32, #tpu.memory_space<vmem>>, %arg2: memref<72x64xbf16, #tpu.memory_space<vmem>>, %arg3: memref<8x64xf32, #tpu.memory_space<vmem>>) attributes {dimension_semantics = [], scalar_prefetch = 0 : i64, scratch_operands = 0 : i64, tpu.core_type = #tpu.core_type<tc>} {
    %c0 = arith.constant 0 : index
    %c0_0 = arith.constant 0 : index
    %0 = vector.load %arg0[%c0, %c0_0] : memref<8x72xbf16, #tpu.memory_space<vmem>>, vector<8x72xbf16>
    %c0_1 = arith.constant 0 : index
    %c0_2 = arith.constant 0 : index
    %1 = vector.load %arg2[%c0_1, %c0_2] : memref<72x64xbf16, #tpu.memory_space<vmem>>, vector<72x64xbf16>
    %cst = arith.constant dense<0.000000e+00> : vector<8x64xf32>
    %2 = tpu.matmul %0, %1, %cst {dimension_numbers = #tpu.dot_dimension_numbers<[1], [0], [0], [1], [0, 0, 1, 1], [], []>} : vector<8x72xbf16>, vector<72x64xbf16>, vector<8x64xf32> -> vector<8x64xf32>
    %c0_3 = arith.constant 0 : index
    %c0_4 = arith.constant 0 : index
    %3 = vector.load %arg1[%c0_3, %c0_4] : memref<8x1xf32, #tpu.memory_space<vmem>>, vector<8x1xf32>
    %4 = vector.broadcast %3 : vector<8x1xf32> to vector<8x64xf32>
    %5 = arith.addf %2, %4 : vector<8x64xf32>
    %cst_5 = arith.constant 0.000000e+00 : f32
    %6 = vector.broadcast %cst_5 : f32 to vector<8x64xf32>
    %7 = arith.cmpf oge, %5, %6 : vector<8x64xf32>
    %cst_6 = arith.constant 0.00999999977 : f32
    %8 = vector.broadcast %cst_6 : f32 to vector<8x64xf32>
    %9 = arith.mulf %8, %5 : vector<8x64xf32>
    %10 = arith.select %7, %5, %9 : vector<8x64xi1>, vector<8x64xf32>
    %cst_7 = arith.constant dense<0.000000e+00> : vector<8xf32>
    %11 = vector.multi_reduction <add>, %10, %cst_7 [1] : vector<8x64xf32> to vector<8xf32>
    %12 = vector.shape_cast %11 : vector<8xf32> to vector<8x1xf32>
    %cst_8 = arith.constant 6.400000e+01 : f32
    %13 = vector.broadcast %cst_8 : f32 to vector<8x1xf32>
    %14 = arith.divf %12, %13 : vector<8x1xf32>
    %15 = vector.broadcast %14 : vector<8x1xf32> to vector<8x64xf32>
    %16 = arith.subf %10, %15 : vector<8x64xf32>
    %17 = arith.mulf %16, %16 : vector<8x64xf32>
    %cst_9 = arith.constant dense<0.000000e+00> : vector<8xf32>
    %18 = vector.multi_reduction <add>, %17, %cst_9 [1] : vector<8x64xf32> to vector<8xf32>
    %19 = vector.shape_cast %18 : vector<8xf32> to vector<8x1xf32>
    %cst_10 = arith.constant 6.300000e+01 : f32
    %20 = vector.broadcast %cst_10 : f32 to vector<8x1xf32>
    %21 = arith.divf %19, %20 : vector<8x1xf32>
    %22 = math.sqrt %21 : vector<8x1xf32>
    %cst_11 = arith.constant 1.000000e-07 : f32
    %23 = vector.broadcast %cst_11 : f32 to vector<8x1xf32>
    %24 = arith.addf %22, %23 : vector<8x1xf32>
    %25 = tpu.reciprocal %24 {approx = true} : vector<8x1xf32> -> vector<8x1xf32>
    %26 = vector.broadcast %25 : vector<8x1xf32> to vector<8x64xf32>
    %27 = arith.mulf %16, %26 : vector<8x64xf32>
    %c0_12 = arith.constant 0 : index
    %c0_13 = arith.constant 0 : index
    %28 = vector.load %arg3[%c0_12, %c0_13] : memref<8x64xf32, #tpu.memory_space<vmem>>, vector<8x64xf32>
    tpu.vector_store %arg3[%c0_12, %c0_13], %27 {strides = array<i32>} : memref<8x64xf32, #tpu.memory_space<vmem>>, vector<8x64xf32>,
    return
  }
}

module attributes {stable_mosaic.version = 11 : i64} {
  func.func @_fused_small_kernel(%arg0: memref<16x72xbf16, #tpu.memory_space<vmem>>, %arg1: memref<16x1xf32, #tpu.memory_space<vmem>>, %arg2: memref<72x16xbf16, #tpu.memory_space<vmem>>, %arg3: memref<16x16xf32, #tpu.memory_space<vmem>>) attributes {dimension_semantics = [], scalar_prefetch = 0 : i64, scratch_operands = 0 : i64, tpu.core_type = #tpu.core_type<tc>} {
    %c0 = arith.constant 0 : index
    %c0_0 = arith.constant 0 : index
    %0 = vector.load %arg0[%c0, %c0_0] : memref<16x72xbf16, #tpu.memory_space<vmem>>, vector<16x72xbf16>
    %c0_1 = arith.constant 0 : index
    %c0_2 = arith.constant 0 : index
    %1 = vector.load %arg2[%c0_1, %c0_2] : memref<72x16xbf16, #tpu.memory_space<vmem>>, vector<72x16xbf16>
    %cst = arith.constant dense<0.000000e+00> : vector<16x16xf32>
    %2 = tpu.matmul %0, %1, %cst {dimension_numbers = #tpu.dot_dimension_numbers<[1], [0], [0], [1], [0, 0, 1, 1], [], []>} : vector<16x72xbf16>, vector<72x16xbf16>, vector<16x16xf32> -> vector<16x16xf32>
    %c0_3 = arith.constant 0 : index
    %c0_4 = arith.constant 0 : index
    %3 = vector.load %arg1[%c0_3, %c0_4] : memref<16x1xf32, #tpu.memory_space<vmem>>, vector<16x1xf32>
    %4 = vector.broadcast %3 : vector<16x1xf32> to vector<16x16xf32>
    %5 = arith.addf %2, %4 : vector<16x16xf32>
    %cst_5 = arith.constant dense<0.000000e+00> : vector<16xf32>
    %6 = vector.multi_reduction <add>, %5, %cst_5 [1] : vector<16x16xf32> to vector<16xf32>
    %7 = vector.shape_cast %6 : vector<16xf32> to vector<16x1xf32>
    %cst_6 = arith.constant 1.600000e+01 : f32
    %8 = vector.broadcast %cst_6 : f32 to vector<16x1xf32>
    %9 = arith.divf %7, %8 : vector<16x1xf32>
    %10 = vector.broadcast %9 : vector<16x1xf32> to vector<16x16xf32>
    %11 = arith.subf %5, %10 : vector<16x16xf32>
    %12 = arith.mulf %11, %11 : vector<16x16xf32>
    %cst_7 = arith.constant dense<0.000000e+00> : vector<16xf32>
    %13 = vector.multi_reduction <add>, %12, %cst_7 [1] : vector<16x16xf32> to vector<16xf32>
    %14 = vector.shape_cast %13 : vector<16xf32> to vector<16x1xf32>
    %cst_8 = arith.constant 1.500000e+01 : f32
    %15 = vector.broadcast %cst_8 : f32 to vector<16x1xf32>
    %16 = arith.divf %14, %15 : vector<16x1xf32>
    %17 = math.sqrt %16 : vector<16x1xf32>
    %cst_9 = arith.constant 1.000000e-07 : f32
    %18 = vector.broadcast %cst_9 : f32 to vector<16x1xf32>
    %19 = arith.addf %17, %18 : vector<16x1xf32>
    %20 = tpu.reciprocal %19 {approx = true} : vector<16x1xf32> -> vector<16x1xf32>
    %21 = vector.broadcast %20 : vector<16x1xf32> to vector<16x16xf32>
    %22 = arith.mulf %11, %21 : vector<16x16xf32>
    %c0_10 = arith.constant 0 : index
    %c0_11 = arith.constant 0 : index
    %23 = vector.load %arg3[%c0_10, %c0_11] : memref<16x16xf32, #tpu.memory_space<vmem>>, vector<16x16xf32>
    tpu.vector_store %arg3[%c0_10, %c0_11], %22 {strides = array<i32>} : memref<16x16xf32, #tpu.memory_space<vmem>>, vector<16x16xf32>,
    return
  }
}

</mosaic_0001>

<llo_original>
// kernel: _forward_impl.4
$region0: #{_forward_impl.4}
  #allocation0 [shape = 'u32[]', space=smem, size = 0x4, offset = 0x4, fixed_abs, tag = 'smem constant byte address 0x4 - core index']
  #allocation1 [shape = 'u32[144,128]{1,0:T(1,128)}', space=vmem, size = 0x12000, scoped, tag = 'internal scratch']
  %s0 = inlined_call_operand.vmem [shape: bf16[8,27], index: 0, kind: input, shape index: {}]
  %s1 = inlined_call_operand.vmem [shape: f32[8,1], index: 1, kind: input, shape index: {}]
  %s2 = inlined_call_operand.vmem [shape: bf16[27,256], index: 2, kind: input, shape index: {}]
  %s3 = inlined_call_operand.vmem [shape: f32[8,256], index: 3, kind: output, shape index: {}]
  %s4 = sld [smem:[#allocation0]]
  $region22: #{_forward_impl.4} parent=0
    _
  %s6 = ssub.s32 1, %s4
  %s7 = scalar_select 0, %s6, %s4
  // Predicated region
  $region2: #{_forward_impl.4} parent=0 // pred_check
    _
  $region3: #{_forward_impl.4} parent=0 // pred_check_branch
    %9 = sbr.rel (0) target = $region5
  $region4: #{_forward_impl.4} parent=0 // pred_region
    _
  $region5: #{_forward_impl.4} parent=0 // pred_fallthru
    _
  // Predicated region
  $region6: #{_forward_impl.4} parent=0 // pred_check
    _
  $region7: #{_forward_impl.4} parent=0 // pred_check_branch
    %11 = sbr.rel (0) target = $region9
  $region8: #{_forward_impl.4} parent=0 // pred_region
    _
  $region9: #{_forward_impl.4} parent=0 // pred_fallthru
    _
  // Predicated region
  $region10: #{_forward_impl.4} parent=0 // pred_check
    _
  $region11: #{_forward_impl.4} parent=0 // pred_check_branch
    %13 = sbr.rel (0) target = $region13
  $region12: #{_forward_impl.4} parent=0 // pred_region
    _
  $region13: #{_forward_impl.4} parent=0 // pred_fallthru
    _
  %v15 = vld [vmem:[%s0] sm:$0xf]
  %v16 = vld [vmem:[%s2] sm:$0xff]
  %v17 = vld [vmem:[%s2 + $0x8] sm:$0xff]
  %v18 = vld [vmem:[%s2 + $0x10] sm:$0xff]
  %v19 = vld [vmem:[%s2 + $0x18] sm:$0x33]
  %v20 = vld [vmem:[%s1] sm:$0xff]
  %22 = vset.pattern.permute.xlu0 0
  %23 = vperm.xlu0 %22, %v20
  %v24 = vpop.permute.xlu0 %23
  %v30 = vunpack.c.l.b16 %v16
  %v31 = vunpack.c.h.b16 %v16
  %v32 = vunpack.c.l.b16 %v17
  %v33 = vunpack.c.h.b16 %v17
  %v34 = vunpack.c.l.b16 %v18
  %v35 = vunpack.c.h.b16 %v18
  %v36 = vunpack.c.l.b16 %v19
  %v37 = vunpack.c.h.b16 %v19
  %v38 = vpack.c.b16 %v32, %v30
  %v39 = vpack.c.b16 %v33, %v31
  %v40 = vpack.c.b16 %v36, %v34
  %v41 = vpack.c.b16 %v37, %v35
  %vm44 = vcmask 220160
  %v46 = vsel %vm44, %v15, 0
  %vm48 = vcmask 1044480
  %vm49 = vcmask 1045504
  %v50 = vsel %vm48, 4294967295, 65535
  %v51 = vsel %vm49, %v50, 0
  %v53 = vand.u32 %v40, %v51
  %v56 = vand.u32 %v41, %v51
  %58 = vmatprep.subr.bf16.mxu0 0
  %59 = vmatpush1.bf16.msra.mxu0 0
  %60 = vmatprep.subr.bf16.mxu0 0
  %61 = vmatpush1.bf16.msra.mxu0 0
  %62 = vmatprep.subr.bf16.mxu0 0
  %63 = vmatpush1.bf16.msra.mxu0 0
  %64 = vmatprep.subr.bf16.mxu0 0
  %65 = vmatpush1.bf16.msra.mxu0 0
  %66 = vmatprep.subr.bf16.mxu0 0
  %67 = vmatpush1.bf16.msra.mxu0 0
  %68 = vmatprep.subr.bf16.mxu0 0
  %69 = vmatpush1.bf16.msra.mxu0 0
  %70 = vmatprep.subr.bf16.mxu0 %v56
  %71 = vmatpush1.bf16.msra.mxu0 %v53
  %72 = vmatprep.subr.bf16.mxu0 %v39
  %73 = vmatpush1.bf16.msra.mxu0 %v38
  %74 = vmatprep.subr.bf16.mxu0 0
  %75 = vmatpush2.bf16.msra.mxu0 0
  %76 = vmatprep.subr.bf16.mxu0 0
  %77 = vmatpush2.bf16.msra.mxu0 0
  %78 = vmatprep.subr.bf16.mxu0 0
  %79 = vmatpush2.bf16.msra.mxu0 0
  %80 = vmatprep.subr.bf16.mxu0 0
  %81 = vmatpush2.bf16.msra.mxu0 0
  %82 = vmatprep.subr.bf16.mxu0 0
  %83 = vmatpush2.bf16.msra.mxu0 0
  %84 = vmatprep.subr.bf16.mxu0 0
  %85 = vmatpush2.bf16.msra.mxu0 0
  %86 = vmatprep.subr.bf16.mxu0 0
  %87 = vmatpush2.bf16.msra.mxu0 0
  %88 = vmatprep.subr.bf16.mxu0 0
  %89 = vmatpush2.bf16.msra.mxu0 0
  %90 = vmatprep.mubr.bf16.mxu0 0
  %91 = vmatmul.mubr.bf16.gmra.mxu0 %v46
  %v92 = vpop.f32.mrf.mxu0
  %v93 = vadd.f32 %v24, %v92
  %v94 = vpop.f32.mrf.mxu0
  %v95 = vadd.f32 %v24, %v94
  %v96 = vpop.f32.mrf.mxu0
  %v97 = vpop.f32.mrf.mxu0
  %98 = vdwg.mxu0
  %vm99 = vcmp.ge.f32.partialorder %v93, 0.0
  %vm100 = vcmp.ge.f32.partialorder %v95, 0.0
  %v101 = vmul.f32 %v93, 0.01
  %v102 = vmul.f32 %v95, 0.01
  %v103 = vsel %vm99, %v93, %v101
  %v104 = vsel %vm100, %v95, %v102
  %v105 = vadd.f32 %v103, %v104
  %106 = vadd.xlane.f32.xlu0 %v105
  %v107 = vpop.xlane.xlu0 %106
  %v108 = vrcp.pop 256.0
  %v109 = vmul.f32 %v107, %v108
  %v110 = vsub.f32 %v103, %v109
  %v111 = vsub.f32 %v104, %v109
  %v112 = vmul.f32 %v110, %v110
  %v113 = vmul.f32 %v111, %v111
  %v114 = vadd.f32 %v112, %v113
  %115 = vadd.xlane.f32.xlu0 %v114
  %v116 = vpop.xlane.xlu0 %115
  %v117 = vrcp.pop 255.0
  %v118 = vmul.f32 %v116, %v117
  %v119 = vrsqrt.pop %v118
  %v120 = vmul.f32 %v118, %v119
  %vm121 = vcmp.eq.f32.partialorder %v118, inf
  %v122 = vsel %vm121, %v118, %v120
  %vm123 = vcmp.eq.f32.partialorder %v118, 0.0
  %v124 = vand.u32 %v118, 2147483648
  %v125 = vsel %vm123, %v124, %v122
  %v126 = vadd.f32 %v125, 1e-07
  %v127 = vrcp.pop %v126
  %v128 = vmul.f32 %v110, %v127
  %v129 = vmul.f32 %v111, %v127
  %130 = vst [vmem:[%s3] sm:$0xff] %v128
  %131 = vst [vmem:[%s3 + $0x8] sm:$0xff] %v129
  // Predicated region
  $region14: #{_forward_impl.4} parent=0 // pred_check
    _
  $region15: #{_forward_impl.4} parent=0 // pred_check_branch
    %133 = sbr.rel (0) target = $region17
  $region16: #{_forward_impl.4} parent=0 // pred_region
    _
  $region17: #{_forward_impl.4} parent=0 // pred_fallthru
    _
  // Predicated region
  $region18: #{_forward_impl.4} parent=0 // pred_check
    _
  $region19: #{_forward_impl.4} parent=0 // pred_check_branch
    %135 = sbr.rel (0) target = $region21
  $region20: #{_forward_impl.4} parent=0 // pred_region
    _
  $region21: #{_forward_impl.4} parent=0 // pred_fallthru
    _

// kernel: _forward_impl.5
$region0: #{_forward_impl.5}
  #allocation0 [shape = 'u32[]', space=smem, size = 0x4, offset = 0x4, fixed_abs, tag = 'smem constant byte address 0x4 - core index']
  #allocation1 [shape = 'u32[144,128]{1,0:T(1,128)}', space=vmem, size = 0x12000, scoped, tag = 'internal scratch']
  %s0 = inlined_call_operand.vmem [shape: bf16[8,72], index: 0, kind: input, shape index: {}]
  %s1 = inlined_call_operand.vmem [shape: f32[8,1], index: 1, kind: input, shape index: {}]
  %s2 = inlined_call_operand.vmem [shape: bf16[72,64], index: 2, kind: input, shape index: {}]
  %s3 = inlined_call_operand.vmem [shape: f32[8,64], index: 3, kind: output, shape index: {}]
  %s4 = sld [smem:[#allocation0]]
  $region22: #{_forward_impl.5} parent=0
    _
  %s6 = ssub.s32 1, %s4
  %s7 = scalar_select 0, %s6, %s4
  // Predicated region
  $region2: #{_forward_impl.5} parent=0 // pred_check
    _
  $region3: #{_forward_impl.5} parent=0 // pred_check_branch
    %9 = sbr.rel (0) target = $region5
  $region4: #{_forward_impl.5} parent=0 // pred_region
    _
  $region5: #{_forward_impl.5} parent=0 // pred_fallthru
    _
  // Predicated region
  $region6: #{_forward_impl.5} parent=0 // pred_check
    _
  $region7: #{_forward_impl.5} parent=0 // pred_check_branch
    %11 = sbr.rel (0) target = $region9
  $region8: #{_forward_impl.5} parent=0 // pred_region
    _
  $region9: #{_forward_impl.5} parent=0 // pred_fallthru
    _
  // Predicated region
  $region10: #{_forward_impl.5} parent=0 // pred_check
    _
  $region11: #{_forward_impl.5} parent=0 // pred_check_branch
    %13 = sbr.rel (0) target = $region13
  $region12: #{_forward_impl.5} parent=0 // pred_region
    _
  $region13: #{_forward_impl.5} parent=0 // pred_fallthru
    _
  %v15 = vld [vmem:[%s0] sm:$0xf]
  %v16 = vld [vmem:[%s2] sm:$0xf]
  %v17 = vld [vmem:[%s2 + $0x4] sm:$0xf]
  %v18 = vld [vmem:[%s2 + $0x8] sm:$0xf]
  %v19 = vld [vmem:[%s2 + $0xc] sm:$0xf]
  %v20 = vld [vmem:[%s2 + $0x10] sm:$0xf]
  %v21 = vld [vmem:[%s2 + $0x14] sm:$0xf]
  %v22 = vld [vmem:[%s2 + $0x18] sm:$0xf]
  %v23 = vld [vmem:[%s2 + $0x1c] sm:$0xf]
  %v24 = vld [vmem:[%s2 + $0x20] sm:$0xf]
  %v25 = vld [vmem:[%s1] sm:$0xff]
  %27 = vset.pattern.permute.xlu0 0
  %28 = vperm.xlu0 %27, %v25
  %v29 = vpop.permute.xlu0 %28
  %v40 = vunpack.c.l.b16 %v16
  %v41 = vunpack.c.l.b16 %v17
  %v42 = vunpack.c.l.b16 %v18
  %v43 = vunpack.c.l.b16 %v19
  %v44 = vunpack.c.l.b16 %v20
  %v45 = vunpack.c.l.b16 %v21
  %v46 = vunpack.c.l.b16 %v22
  %v47 = vunpack.c.l.b16 %v23
  %v48 = vunpack.c.l.b16 %v24
  %v49 = vpack.c.b16 %v41, %v40
  %v50 = vpack.c.b16 %v43, %v42
  %v51 = vpack.c.b16 %v45, %v44
  %v52 = vpack.c.b16 %v47, %v46
  %v53 = vpack.c.b16 %v48, %v48
  %vm58 = vcmask 588800
  %v60 = vsel %vm58, %v15, 0
  %vm62 = vcmask 1043456
  %v64 = vsel %vm62, %v53, 0
  %66 = vmatprep.subr.bf16.mxu0 0
  %67 = vmatpush1.bf16.msra.mxu0 0
  %68 = vmatprep.subr.bf16.mxu0 0
  %69 = vmatpush1.bf16.msra.mxu0 0
  %70 = vmatprep.subr.bf16.mxu0 0
  %71 = vmatpush1.bf16.msra.mxu0 0
  %72 = vmatprep.subr.bf16.mxu0 0
  %73 = vmatpush1.bf16.msra.mxu0 %v64
  %74 = vmatprep.subr.bf16.mxu0 0
  %75 = vmatpush1.bf16.msra.mxu0 %v52
  %76 = vmatprep.subr.bf16.mxu0 0
  %77 = vmatpush1.bf16.msra.mxu0 %v51
  %78 = vmatprep.subr.bf16.mxu0 0
  %79 = vmatpush1.bf16.msra.mxu0 %v50
  %80 = vmatprep.subr.bf16.mxu0 0
  %81 = vmatpush1.bf16.msra.mxu0 %v49
  %82 = vmatprep.subr.bf16.mxu0 0
  %83 = vmatpush2.bf16.msra.mxu0 0
  %84 = vmatprep.subr.bf16.mxu0 0
  %85 = vmatpush2.bf16.msra.mxu0 0
  %86 = vmatprep.subr.bf16.mxu0 0
  %87 = vmatpush2.bf16.msra.mxu0 0
  %88 = vmatprep.subr.bf16.mxu0 0
  %89 = vmatpush2.bf16.msra.mxu0 0
  %90 = vmatprep.subr.bf16.mxu0 0
  %91 = vmatpush2.bf16.msra.mxu0 0
  %92 = vmatprep.subr.bf16.mxu0 0
  %93 = vmatpush2.bf16.msra.mxu0 0
  %94 = vmatprep.subr.bf16.mxu0 0
  %95 = vmatpush2.bf16.msra.mxu0 0
  %96 = vmatprep.subr.bf16.mxu0 0
  %97 = vmatpush2.bf16.msra.mxu0 0
  %98 = vmatprep.mubr.bf16.mxu0 0
  %99 = vmatmul.mubr.bf16.gmra.mxu0 %v60
  %v100 = vpop.f32.mrf.mxu0
  %v101 = vadd.f32 %v29, %v100
  %v102 = vpop.f32.mrf.mxu0
  %v103 = vpop.f32.mrf.mxu0
  %v104 = vpop.f32.mrf.mxu0
  %105 = vdwg.mxu0
  %vm106 = vcmp.ge.f32.partialorder %v101, 0.0
  %v107 = vmul.f32 %v101, 0.01
  %v108 = vsel %vm106, %v101, %v107
  %vm109 = vcmask 523264
  %v110 = vsel %vm109, %v108, 0.0
  %111 = vadd.xlane.f32.xlu0 %v110
  %v112 = vpop.xlane.xlu0 %111
  %v113 = vrcp.pop 64.0
  %v114 = vmul.f32 %v112, %v113
  %v115 = vsub.f32 %v108, %v114
  %v116 = vmul.f32 %v115, %v115
  %v117 = vsel %vm109, %v116, 0.0
  %118 = vadd.xlane.f32.xlu0 %v117
  %v119 = vpop.xlane.xlu0 %118
  %v120 = vrcp.pop 63.0
  %v121 = vmul.f32 %v119, %v120
  %v122 = vrsqrt.pop %v121
  %v123 = vmul.f32 %v121, %v122
  %vm124 = vcmp.eq.f32.partialorder %v121, inf
  %v125 = vsel %vm124, %v121, %v123
  %vm126 = vcmp.eq.f32.partialorder %v121, 0.0
  %v127 = vand.u32 %v121, 2147483648
  %v128 = vsel %vm126, %v127, %v125
  %v129 = vadd.f32 %v128, 1e-07
  %v130 = vrcp.pop %v129
  %v131 = vmul.f32 %v115, %v130
  %132 = vst.msk [vmem:[%s3] sm:$0xff] %vm109, %v131
  // Predicated region
  $region14: #{_forward_impl.5} parent=0 // pred_check
    _
  $region15: #{_forward_impl.5} parent=0 // pred_check_branch
    %134 = sbr.rel (0) target = $region17
  $region16: #{_forward_impl.5} parent=0 // pred_region
    _
  $region17: #{_forward_impl.5} parent=0 // pred_fallthru
    _
  // Predicated region
  $region18: #{_forward_impl.5} parent=0 // pred_check
    _
  $region19: #{_forward_impl.5} parent=0 // pred_check_branch
    %136 = sbr.rel (0) target = $region21
  $region20: #{_forward_impl.5} parent=0 // pred_region
    _
  $region21: #{_forward_impl.5} parent=0 // pred_fallthru
    _

// kernel: _forward_impl.7
$region0: #{_forward_impl.7}
  #allocation0 [shape = 'u32[]', space=smem, size = 0x4, offset = 0x4, fixed_abs, tag = 'smem constant byte address 0x4 - core index']
  #allocation1 [shape = 'u32[144,128]{1,0:T(1,128)}', space=vmem, size = 0x12000, scoped, tag = 'internal scratch']
  %s0 = inlined_call_operand.vmem [shape: bf16[16,72], index: 0, kind: input, shape index: {}]
  %s1 = inlined_call_operand.vmem [shape: f32[16,1], index: 1, kind: input, shape index: {}]
  %s2 = inlined_call_operand.vmem [shape: bf16[72,16], index: 2, kind: input, shape index: {}]
  %s3 = inlined_call_operand.vmem [shape: f32[16,16], index: 3, kind: output, shape index: {}]
  %s4 = sld [smem:[#allocation0]]
  $region22: #{_forward_impl.7} parent=0
    _
  %s6 = ssub.s32 1, %s4
  %s7 = scalar_select 0, %s6, %s4
  // Predicated region
  $region2: #{_forward_impl.7} parent=0 // pred_check
    _
  $region3: #{_forward_impl.7} parent=0 // pred_check_branch
    %9 = sbr.rel (0) target = $region5
  $region4: #{_forward_impl.7} parent=0 // pred_region
    _
  $region5: #{_forward_impl.7} parent=0 // pred_fallthru
    _
  // Predicated region
  $region6: #{_forward_impl.7} parent=0 // pred_check
    _
  $region7: #{_forward_impl.7} parent=0 // pred_check_branch
    %11 = sbr.rel (0) target = $region9
  $region8: #{_forward_impl.7} parent=0 // pred_region
    _
  $region9: #{_forward_impl.7} parent=0 // pred_fallthru
    _
  // Predicated region
  $region10: #{_forward_impl.7} parent=0 // pred_check
    _
  $region11: #{_forward_impl.7} parent=0 // pred_check_branch
    %13 = sbr.rel (0) target = $region13
  $region12: #{_forward_impl.7} parent=0 // pred_region
    _
  $region13: #{_forward_impl.7} parent=0 // pred_fallthru
    _
  %v15 = vld [vmem:[%s0] sm:$0xf]
  %v16 = vld [vmem:[%s0 + $0x4] sm:$0xf]
  %v17 = vld [vmem:[%s2] sm:$0xf]
  %v18 = vld [vmem:[%s2 + $0x4] sm:$0xf]
  %v19 = vld [vmem:[%s2 + $0x8] sm:$0xf]
  %v20 = vld [vmem:[%s2 + $0xc] sm:$0xf]
  %v21 = vld [vmem:[%s2 + $0x10] sm:$0xf]
  %v22 = vld [vmem:[%s2 + $0x14] sm:$0xf]
  %v23 = vld [vmem:[%s2 + $0x18] sm:$0xf]
  %v24 = vld [vmem:[%s2 + $0x1c] sm:$0xf]
  %v25 = vld [vmem:[%s2 + $0x20] sm:$0xf]
  %v26 = vld [vmem:[%s1] sm:$0xff]
  %v27 = vld [vmem:[%s1 + $0x8] sm:$0xff]
  %29 = vset.pattern.permute.xlu0 0
  %30 = vperm.xlu0 %29, %v26
  %v31 = vpop.permute.xlu0 %30
  %34 = vset.pattern.permute.xlu0 0
  %35 = vperm.xlu0 %34, %v27
  %v36 = vpop.permute.xlu0 %35
  %v40 = vunpack.c.l.b16 %v15
  %v41 = vunpack.c.l.b16 %v16
  %v42 = vpack.c.b16 %v41, %v40
  %v52 = vunpack.c.l.b16 %v17
  %v53 = vunpack.c.l.b16 %v18
  %v54 = vunpack.c.l.b16 %v19
  %v55 = vunpack.c.l.b16 %v20
  %v56 = vunpack.c.l.b16 %v21
  %v57 = vunpack.c.l.b16 %v22
  %v58 = vunpack.c.l.b16 %v23
  %v59 = vunpack.c.l.b16 %v24
  %v60 = vunpack.c.l.b16 %v25
  %v61 = vpack.c.b16 %v53, %v52
  %v62 = vpack.c.b16 %v55, %v54
  %v63 = vpack.c.b16 %v57, %v56
  %v64 = vpack.c.b16 %v59, %v58
  %v65 = vpack.c.b16 %v60, %v60
  %vm70 = vcmask 588800
  %v72 = vsel %vm70, %v42, 0
  %vm74 = vcmask 1043456
  %v76 = vsel %vm74, %v65, 0
  %78 = vmatprep.subr.bf16.mxu0 0
  %79 = vmatpush1.bf16.msra.mxu0 0
  %80 = vmatprep.subr.bf16.mxu0 0
  %81 = vmatpush1.bf16.msra.mxu0 0
  %82 = vmatprep.subr.bf16.mxu0 0
  %83 = vmatpush1.bf16.msra.mxu0 0
  %84 = vmatprep.subr.bf16.mxu0 0
  %85 = vmatpush1.bf16.msra.mxu0 %v76
  %86 = vmatprep.subr.bf16.mxu0 0
  %87 = vmatpush1.bf16.msra.mxu0 %v64
  %88 = vmatprep.subr.bf16.mxu0 0
  %89 = vmatpush1.bf16.msra.mxu0 %v63
  %90 = vmatprep.subr.bf16.mxu0 0
  %91 = vmatpush1.bf16.msra.mxu0 %v62
  %92 = vmatprep.subr.bf16.mxu0 0
  %93 = vmatpush1.bf16.msra.mxu0 %v61
  %94 = vmatprep.subr.bf16.mxu0 0
  %95 = vmatpush2.bf16.msra.mxu0 0
  %96 = vmatprep.subr.bf16.mxu0 0
  %97 = vmatpush2.bf16.msra.mxu0 0
  %98 = vmatprep.subr.bf16.mxu0 0
  %99 = vmatpush2.bf16.msra.mxu0 0
  %100 = vmatprep.subr.bf16.mxu0 0
  %101 = vmatpush2.bf16.msra.mxu0 0
  %102 = vmatprep.subr.bf16.mxu0 0
  %103 = vmatpush2.bf16.msra.mxu0 0
  %104 = vmatprep.subr.bf16.mxu0 0
  %105 = vmatpush2.bf16.msra.mxu0 0
  %106 = vmatprep.subr.bf16.mxu0 0
  %107 = vmatpush2.bf16.msra.mxu0 0
  %108 = vmatprep.subr.bf16.mxu0 0
  %109 = vmatpush2.bf16.msra.mxu0 0
  %110 = vmatprep.mubr.bf16.mxu0 0
  %111 = vmatmul.mubr.bf16.gmra.mxu0 %v72
  %v112 = vpop.f32.mrf.mxu0
  %v113 = vadd.f32 %v31, %v112
  %v114 = vpop.f32.mrf.mxu0
  %v115 = vpop.f32.mrf.mxu0
  %v116 = vadd.f32 %v36, %v115
  %v117 = vpop.f32.mrf.mxu0
  %118 = vdwg.mxu0
  %vm119 = vcmask 130048
  %v120 = vsel %vm119, %v113, 0.0
  %121 = vadd.xlane.f32.xlu0 %v120
  %v122 = vpop.xlane.xlu0 %121
  %v123 = vsel %vm119, %v116, 0.0
  %124 = vadd.xlane.f32.xlu0 %v123
  %v125 = vpop.xlane.xlu0 %124
  %v126 = vrcp.pop 16.0
  %v127 = vmul.f32 %v122, %v126
  %v128 = vmul.f32 %v125, %v126
  %v129 = vsub.f32 %v113, %v127
  %v130 = vsub.f32 %v116, %v128
  %v131 = vmul.f32 %v129, %v129
  %v132 = vmul.f32 %v130, %v130
  %v133 = vsel %vm119, %v131, 0.0
  %134 = vadd.xlane.f32.xlu0 %v133
  %v135 = vpop.xlane.xlu0 %134
  %v136 = vsel %vm119, %v132, 0.0
  %137 = vadd.xlane.f32.xlu0 %v136
  %v138 = vpop.xlane.xlu0 %137
  %v139 = vrcp.pop 15.0
  %v140 = vmul.f32 %v135, %v139
  %v141 = vmul.f32 %v138, %v139
  %v142 = vrsqrt.pop %v140
  %v143 = vmul.f32 %v140, %v142
  %vm144 = vcmp.eq.f32.partialorder %v140, inf
  %v145 = vsel %vm144, %v140, %v143
  %vm146 = vcmp.eq.f32.partialorder %v140, 0.0
  %v147 = vand.u32 %v140, 2147483648
  %v148 = vsel %vm146, %v147, %v145
  %v149 = vrsqrt.pop %v141
  %v150 = vmul.f32 %v141, %v149
  %vm151 = vcmp.eq.f32.partialorder %v141, inf
  %v152 = vsel %vm151, %v141, %v150
  %vm153 = vcmp.eq.f32.partialorder %v141, 0.0
  %v154 = vand.u32 %v141, 2147483648
  %v155 = vsel %vm153, %v154, %v152
  %v156 = vadd.f32 %v148, 1e-07
  %v157 = vadd.f32 %v155, 1e-07
  %v158 = vrcp.pop %v156
  %v159 = vrcp.pop %v157
  %v160 = vmul.f32 %v129, %v158
  %v161 = vmul.f32 %v130, %v159
  %162 = vst.msk [vmem:[%s3] sm:$0xff] %vm119, %v160
  %163 = vst.msk [vmem:[%s3 + $0x8] sm:$0xff] %vm119, %v161
  // Predicated region
  $region14: #{_forward_impl.7} parent=0 // pred_check
    _
  $region15: #{_forward_impl.7} parent=0 // pred_check_branch
    %165 = sbr.rel (0) target = $region17
  $region16: #{_forward_impl.7} parent=0 // pred_region
    _
  $region17: #{_forward_impl.7} parent=0 // pred_fallthru
    _
  // Predicated region
  $region18: #{_forward_impl.7} parent=0 // pred_check
    _
  $region19: #{_forward_impl.7} parent=0 // pred_check_branch
    %167 = sbr.rel (0) target = $region21
  $region20: #{_forward_impl.7} parent=0 // pred_region
    _
  $region21: #{_forward_impl.7} parent=0 // pred_fallthru
    _

</llo_original>
